<compile_context>
chip_gen: v5e
topology: v5e:2x2
jax: 0.10.0
libtpu: 0.0.40
codegen_flags: <defaults>
</compile_context>

<pallas_src>
import math
import functools

import jax
import jax.numpy as jnp
from jax.experimental import pallas as pl
from jax.experimental.pallas import tpu as pltpu


def make_pos_embedding(emb_size: int, maxlen: int = 10000,
                       dtype=jnp.float32) -> jnp.ndarray:
    """Deterministic sinusoidal table, shape (maxlen, 1, emb_size) like the torch buffer."""
    assert emb_size % 2 == 0, "emb_size must be even (same restriction as the torch module)"
    den = jnp.exp(-jnp.arange(0, emb_size, 2, dtype=jnp.float32)
                  * (math.log(10000.0) / emb_size))
    pos = jnp.arange(0, maxlen, dtype=jnp.float32).reshape(maxlen, 1)
    pe = jnp.zeros((maxlen, emb_size), dtype=jnp.float32)
    pe = pe.at[:, 0::2].set(jnp.sin(pos * den))
    pe = pe.at[:, 1::2].set(jnp.cos(pos * den))
    return pe[:, None, :].astype(dtype)  # (maxlen, 1, emb_size)


def _posenc_kernel(x_ref, pe_ref, o_ref, *, batch):
    # x_ref / o_ref : (TILE_S, B*E) lane-dense slab; pe_ref : (TILE_S, E)
    pe = pe_ref[...]
    if batch > 1:
        # replicate along lanes: flat column b*E + e picks up pe[:, e]
        pe = jnp.tile(pe, (1, batch))
    o_ref[...] = x_ref[...] + pe


def _posenc_dropout_kernel(x_ref, pe_ref, bits_ref, o_ref, *,
                           batch, keep_thresh, scale):
    pe = pe_ref[...]
    if batch > 1:
        pe = jnp.tile(pe, (1, batch))
    y = x_ref[...] + pe
    # P(bits < keep_thresh) == dropout_p  -> keep with prob 1-p, pure int compare
    keep = bits_ref[...] >= jnp.uint32(keep_thresh)
    s = jnp.asarray(scale, dtype=y.dtype)
    z = jnp.zeros((), dtype=y.dtype)
    o_ref[...] = y * jnp.where(keep, s, z)


def positional_encoding(token_embedding, pos_embedding, *, dropout_p=0.1,
                        training=False, rng=None):
    """token_embedding: (S, B, E); pos_embedding: (maxlen, 1, E) or (maxlen, E)."""
    S, B, E = token_embedding.shape
    pe2d = pos_embedding.reshape(pos_embedding.shape[0], E) \
        if pos_embedding.ndim == 3 else pos_embedding
    assert pe2d.shape[0] >= S, "sequence longer than pos-embedding table"
    # cast the (tiny) table to the token dtype once -> no per-tile cast, half pe DMA for bf16
    pe2d = pe2d.astype(token_embedding.dtype)

    cols = B * E
    x2d = token_embedding.reshape(S, cols)  # free, contiguous

    use_dropout = bool(training) and float(dropout_p) > 0.0
    if use_dropout:
        assert 0.0 <= dropout_p < 1.0, "dropout_p must be in [0, 1)"
        if rng is None:
            rng = jax.random.PRNGKey(0)
        # host-side random bits streamed through the kernel (portable to interpret mode)
        bits2d = jax.random.bits(rng, (S, cols), dtype=jnp.uint32)

    # ---------------- tile size selection ----------------
    xb = jnp.dtype(token_embedding.dtype).itemsize
    pb = jnp.dtype(pe2d.dtype).itemsize
    # double-buffered x-in + x-out, double-buffered pe, plus in-kernel compute
    # temporary budgeted at 4 B/elem (worst case: v5e upcasts bf16 per-vreg).
    per_row = 4 * cols * xb + 2 * E * pb + cols * 4
    if use_dropout:
        per_row += 2 * cols * 4 + cols * 4       # double-buffered bits + keep-mask temp
    budget = 24 * 1024 * 1024                    # tile budget; vmem limit below is 48 MiB
    tile_budget = max(8, min(2048, (budget // per_row) // 8 * 8))

    s_pad8 = ((S + 7) // 8) * 8
    if s_pad8 >= 4 * 8:
        # guarantee >= ~4 grid steps so both v7x TensorCores get work
        steps_cap = max(8, ((pl.cdiv(S, 4) + 7) // 8) * 8)
    else:
        steps_cap = s_pad8
    tile_s = min(tile_budget, steps_cap, s_pad8)

    if S % 8 != 0 and tile_s >= S:
        # degenerate small unaligned S: single full-extent block (block dims ==
        # array dims satisfies the (8,128) rule); slice pe so its block is full too.
        tile_s = S
        pe2d = pe2d[:S]
    grid = (pl.cdiv(S, tile_s),)

    # ---------------- pallas_call ----------------
    in_specs = [
        pl.BlockSpec((tile_s, cols), lambda i: (i, 0)),  # x slab
        pl.BlockSpec((tile_s, E),    lambda i: (i, 0)),  # pe rows
    ]
    args = [x2d, pe2d]
    if use_dropout:
        in_specs.append(pl.BlockSpec((tile_s, cols), lambda i: (i, 0)))  # random bits
        args.append(bits2d)
        thresh = min(int(round(float(dropout_p) * 4294967296.0)), 4294967295)
        kernel = functools.partial(_posenc_dropout_kernel, batch=B,
                                   keep_thresh=thresh,
                                   scale=float(1.0 / (1.0 - float(dropout_p))))
    else:
        kernel = functools.partial(_posenc_kernel, batch=B)

    out2d = pl.pallas_call(
        kernel,
        out_shape=jax.ShapeDtypeStruct((S, cols), token_embedding.dtype),
        grid=grid,
        in_specs=in_specs,
        out_specs=pl.BlockSpec((tile_s, cols), lambda i: (i, 0)),
        compiler_params=pltpu.CompilerParams(
            dimension_semantics=("parallel",),       # independent tiles -> 2 TCs on v7x
            vmem_limit_bytes=48 * 1024 * 1024,       # safe on v5e/v6e and v7x (64 MiB/TC)
        ),
    )(*args)

    return out2d.reshape(S, B, E)


if __name__ == "__main__":
    emb_size = 32
    seq_len = 8
    batch = 2
    dropout = 0.1

    key = jax.random.PRNGKey(0)
    kx, kd = jax.random.split(key)
    x = jax.random.normal(kx, (seq_len, batch, emb_size), dtype=jnp.float32)

    pos_embedding = make_pos_embedding(emb_size, maxlen=10000, dtype=x.dtype)

    # eval mode: identity dropout, pure broadcast add
    out = positional_encoding(x, pos_embedding, dropout_p=dropout, training=False)
    out = jax.block_until_ready(out)

    ref = x + pos_embedding[:seq_len]
    assert out.shape == (seq_len, batch, emb_size)
    assert jnp.allclose(out, ref, atol=1e-6), "mismatch vs reference (eval mode)"

    # training mode: every element must be 0 or ref/(1-p) (inverted dropout)
    out_tr = positional_encoding(x, pos_embedding, dropout_p=dropout,
                                 training=True, rng=kd)
    out_tr = jax.block_until_ready(out_tr)
    scaled = ref / (1.0 - dropout)
    ok = jnp.all(jnp.isclose(out_tr, scaled, atol=1e-5) | (out_tr == 0))
    assert bool(ok), "dropout output not of expected {0, x/(1-p)} form"

    print("KERNEL_OK")
</pallas_src>

<mosaic_0001>
module attributes {stable_mosaic.version = 11 : i64} {
  func.func @_posenc_kernel(%arg0: i32, %arg1: memref<8x64xf32, #tpu.memory_space<vmem>>, %arg2: memref<8x32xf32, #tpu.memory_space<vmem>>, %arg3: memref<8x64xf32, #tpu.memory_space<vmem>>) attributes {dimension_semantics = [#tpu.dimension_semantics<parallel>], iteration_bounds = array<i64: 1>, scalar_prefetch = 0 : i64, scratch_operands = 0 : i64, tpu.core_type = #tpu.core_type<tc>, window_params = [{transform_indices = @transform_0, window_bounds = array<i64: 8, 64>}, {transform_indices = @transform_1, window_bounds = array<i64: 8, 32>}, {transform_indices = @transform_2, window_bounds = array<i64: 8, 64>}]} {
    %c0 = arith.constant 0 : index
    %c0_0 = arith.constant 0 : index
    %0 = vector.load %arg2[%c0, %c0_0] : memref<8x32xf32, #tpu.memory_space<vmem>>, vector<8x32xf32>
    %1 = tpu.concatenate %0, %0 in 1 : vector<8x32xf32>, vector<8x32xf32> -> vector<8x64xf32>
    %c0_1 = arith.constant 0 : index
    %c0_2 = arith.constant 0 : index
    %2 = vector.load %arg1[%c0_1, %c0_2] : memref<8x64xf32, #tpu.memory_space<vmem>>, vector<8x64xf32>
    %3 = arith.addf %2, %1 : vector<8x64xf32>
    %c0_3 = arith.constant 0 : index
    %c0_4 = arith.constant 0 : index
    %4 = vector.load %arg3[%c0_3, %c0_4] : memref<8x64xf32, #tpu.memory_space<vmem>>, vector<8x64xf32>
    tpu.vector_store %arg3[%c0_3, %c0_4], %3 {strides = array<i32>} : memref<8x64xf32, #tpu.memory_space<vmem>>, vector<8x64xf32>,
    return
  }
  func.func @transform_0(%arg0: i32) -> (i32, i32) {
    %c0_i32 = arith.constant 0 : i32
    %c0_i32_0 = arith.constant 0 : i32
    return %arg0, %c0_i32 : i32, i32
  }
  func.func @transform_1(%arg0: i32) -> (i32, i32) {
    %c0_i32 = arith.constant 0 : i32
    %c0_i32_0 = arith.constant 0 : i32
    return %arg0, %c0_i32 : i32, i32
  }
  func.func @transform_2(%arg0: i32) -> (i32, i32) {
    %c0_i32 = arith.constant 0 : i32
    %c0_i32_0 = arith.constant 0 : i32
    return %arg0, %c0_i32 : i32, i32
  }
}

</mosaic_0001>

<llo_original>
// kernel: tpu_custom_call.1
$region0: #{tpu_custom_call.1}
  #allocation0 [shape = 'u32[]', space=smem, size = 0x4, offset = 0x4, fixed_abs, tag = 'smem constant byte address 0x4 - core index']
  #allocation1 [shape = 'u32[72,128]{1,0:T(1,128)}', space=vmem, size = 0x9000, scoped, tag = 'internal scratch']
  %s0 = inlined_call_operand.vmem [shape: f32[8,64], index: 0, kind: input, shape index: {}]
  %s1 = inlined_call_operand.vmem [shape: f32[10000,32], index: 1, kind: input, shape index: {}]
  %s2 = inlined_call_operand.hbm [shape: f32[8,64], index: 2, kind: output, shape index: {}]
  %s3 = sld [smem:[#allocation0]]
  $region18: #{tpu_custom_call.1} parent=0
    _
  %s5 = ssub.s32 1, %s3
  %s6 = scalar_select 0, %s5, %s3
  $region1: #{tpu_custom_call.1} parent=0
    #allocation2 [shape = 'u8[4096]{0}', space=vmem, size = 0x1000, scoped, tag = 'output window, operand 0, single buffered']
    #allocation3 [shape = 's32[1]{0}', space=sflag, size = 0x4, scoped, tag = 'scoped memory for tpu_custom_call.1']
    %7 = vsyncpa [#allocation3], 0
    // Predicated region
    $region2: #{tpu_custom_call.1} parent=1 // pred_check
      _
    $region3: #{tpu_custom_call.1} parent=1 // pred_check_branch
      %9 = sbr.rel (0) target = $region5
    $region4: #{tpu_custom_call.1} parent=1 // pred_region
      _
    $region5: #{tpu_custom_call.1} parent=1 // pred_fallthru
      _
    // Predicated region
    $region6: #{tpu_custom_call.1} parent=1 // pred_check
      _
    $region7: #{tpu_custom_call.1} parent=1 // pred_check_branch
      %11 = sbr.rel (0) target = $region9
    $region8: #{tpu_custom_call.1} parent=1 // pred_region
      _
    $region9: #{tpu_custom_call.1} parent=1 // pred_fallthru
      _
    %v12 = vld [vmem:[%s1] sm:$0xff]
    %14 = vrot.lane.b32.xlu0 %v12, 32
    %v15 = vpop.permute.xlu0 %14
    %vm17 = vcmask 261120
    %v18 = vsel %vm17, %v12, %v15
    %v19 = vld [vmem:[%s0] sm:$0xff]
    %v20 = vadd.f32 %v19, %v18
    %vm21 = vcmask 523264
    %22 = vst.msk [vmem:[#allocation2] sm:$0xff] %vm21, %v20
    // Predicated region
    $region10: #{tpu_custom_call.1} parent=1 // pred_check
      _
    $region11: #{tpu_custom_call.1} parent=1 // pred_check_branch
      %24 = sbr.rel (0) target = $region13
    $region12: #{tpu_custom_call.1} parent=1 // pred_region
      %26 = vsyncadd [#allocation3], 0
      %s28 = sshll.u32 [#allocation2], 4
      %s29 = int_to_ptr.vmem [resolvable:$true] %s28
      %s30 = sshll.u32 %s2, 4
      %s31 = int_to_ptr.hbm [resolvable:$true] %s30
      %33 = dma.vmem_to_hbm [thread:$0]  %s29, 128, %s31, [#allocation3]
    $region13: #{tpu_custom_call.1} parent=1 // pred_fallthru
      _
    // Predicated region
    $region14: #{tpu_custom_call.1} parent=1 // pred_check
      _
    $region15: #{tpu_custom_call.1} parent=1 // pred_check_branch
      %35 = sbr.rel (0) target = $region17
    $region16: #{tpu_custom_call.1} parent=1 // pred_region
      %37 = dma.done [#allocation3], 128
    $region17: #{tpu_custom_call.1} parent=1 // pred_fallthru
      _
    %38 = vsyncpa [#allocation3], 1

</llo_original>
